<compile_context>
chip_gen: v7x
topology: tpu7x:2x2x1
jax: 0.10.0
libtpu: 0.0.40
codegen_flags: <defaults>
</compile_context>

<pallas_src>
import math

import jax
import jax.numpy as jnp
from jax.experimental import pallas as pl
from jax.experimental.pallas import tpu as pltpu


def _round_up(a: int, b: int) -> int:
    return ((a + b - 1) // b) * b


def _linear_bias_kernel(x_ref, w_ref, b_ref, o_ref, acc_ref):
    k = pl.program_id(2)

    @pl.when(k == 0)
    def _():
        # Fold bias into accumulator init so it is added exactly once.
        acc_ref[...] = jnp.broadcast_to(
            b_ref[...].astype(jnp.float32), acc_ref.shape)

    acc_ref[...] += jnp.dot(x_ref[...], w_ref[...],
                            preferred_element_type=jnp.float32)

    @pl.when(k == pl.num_programs(2) - 1)
    def _():
        o_ref[...] = acc_ref[...].astype(o_ref.dtype)


def _linear_kernel(x_ref, w_ref, o_ref, acc_ref):
    k = pl.program_id(2)

    @pl.when(k == 0)
    def _():
        acc_ref[...] = jnp.zeros_like(acc_ref)

    acc_ref[...] += jnp.dot(x_ref[...], w_ref[...],
                            preferred_element_type=jnp.float32)

    @pl.when(k == pl.num_programs(2) - 1)
    def _():
        o_ref[...] = acc_ref[...].astype(o_ref.dtype)


def prepare_for_mha(x, w, b, num_heads, dim_k, *,
                    tm=256, tn=256, tk=512,
                    compute_dtype=None,
                    vmem_limit_bytes=None):
    """Pallas implementation of PrepareForMultiHeadAttention.forward.

    x: [..., dim_model]
    w: [dim_model, num_heads * dim_k]   (transposed vs. PyTorch's (out, in))
    b: [num_heads * dim_k] or None
    returns: [..., num_heads, dim_k]
    """
    head_shape = x.shape[:-1]
    dim_model = x.shape[-1]
    d_out = num_heads * dim_k
    n_tok = 1
    for s in head_shape:
        n_tok *= s

    out_dtype = x.dtype
    if compute_dtype is not None:
        # e.g. jnp.bfloat16 to halve HBM weight traffic; f32 accumulation kept.
        x = x.astype(compute_dtype)
        w = w.astype(compute_dtype)
        if b is not None:
            b = b.astype(compute_dtype)

    x_flat = x.reshape(n_tok, dim_model)

    # Tile sizes: lane-dense (>=128-wide) N tiles, sublane-aligned (mult of 8)
    # M tiles, clipped to the padded problem size so tiny shapes still work.
    tm = min(tm, _round_up(n_tok, 8))
    tn = min(tn, _round_up(d_out, 128))
    tk = min(tk, _round_up(dim_model, 128))

    M = _round_up(n_tok, tm)
    N = _round_up(d_out, tn)
    K = _round_up(dim_model, tk)

    # Zero-pad ragged edges; padded K contributes 0 to the dot, padded M rows /
    # N cols are sliced off below.
    if (M, K) != (n_tok, dim_model):
        x_flat = jnp.pad(x_flat, ((0, M - n_tok), (0, K - dim_model)))
    w_p = w
    if (K, N) != (dim_model, d_out):
        w_p = jnp.pad(w, ((0, K - dim_model), (0, N - d_out)))

    grid = (M // tm, N // tn, K // tk)

    cost = pl.CostEstimate(
        flops=2 * M * N * K,
        transcendentals=0,
        bytes_accessed=(x_flat.size * x_flat.dtype.itemsize
                        + w_p.size * w_p.dtype.itemsize
                        + M * N * jnp.dtype(out_dtype).itemsize),
    )

    compiler_params = pltpu.CompilerParams(
        dimension_semantics=("parallel", "parallel", "arbitrary"),
        vmem_limit_bytes=vmem_limit_bytes,
    )

    x_spec = pl.BlockSpec((tm, tk), lambda i, j, k: (i, k))
    w_spec = pl.BlockSpec((tk, tn), lambda i, j, k: (k, j))
    o_spec = pl.BlockSpec((tm, tn), lambda i, j, k: (i, j))
    scratch = [pltpu.VMEM((tm, tn), jnp.float32)]

    if b is not None:
        b2d = b.reshape(1, d_out)
        if N != d_out:
            b2d = jnp.pad(b2d, ((0, 0), (0, N - d_out)))
        b_spec = pl.BlockSpec((1, tn), lambda i, j, k: (0, j))
        out_p = pl.pallas_call(
            _linear_bias_kernel,
            out_shape=jax.ShapeDtypeStruct((M, N), out_dtype),
            grid_spec=pltpu.PrefetchScalarGridSpec(
                num_scalar_prefetch=0,
                grid=grid,
                in_specs=[x_spec, w_spec, b_spec],
                out_specs=o_spec,
                scratch_shapes=scratch,
            ),
            compiler_params=compiler_params,
            cost_estimate=cost,
        )(x_flat, w_p, b2d)
    else:
        out_p = pl.pallas_call(
            _linear_kernel,
            out_shape=jax.ShapeDtypeStruct((M, N), out_dtype),
            grid_spec=pltpu.PrefetchScalarGridSpec(
                num_scalar_prefetch=0,
                grid=grid,
                in_specs=[x_spec, w_spec],
                out_specs=o_spec,
                scratch_shapes=scratch,
            ),
            compiler_params=compiler_params,
            cost_estimate=cost,
        )(x_flat, w_p)

    out = out_p[:n_tok, :d_out]
    return out.reshape(*head_shape, num_heads, dim_k)


def init_params(key, dim_model, num_heads, dim_k, bias=True, dtype=jnp.float32):
    """Deterministic param init mirroring nn.Linear (xavier_uniform-style)."""
    d_out = num_heads * dim_k
    kw, kb = jax.random.split(key)
    limit = math.sqrt(6.0 / (dim_model + d_out))
    w = jax.random.uniform(kw, (dim_model, d_out), dtype, -limit, limit)
    if bias:
        bl = 1.0 / math.sqrt(dim_model)
        b = jax.random.uniform(kb, (d_out,), dtype, -bl, bl)
    else:
        b = None
    return w, b


if __name__ == "__main__":
    # x: [seq, batch, dim_model] -> out: [seq, batch, num_heads, dim_k]
    seq, batch, dim_model = 8, 2, 32
    num_heads, dim_k = 4, 8

    key = jax.random.PRNGKey(0)
    kx, kp = jax.random.split(key)
    x = jax.random.normal(kx, (seq, batch, dim_model), jnp.float32)
    w, b = init_params(kp, dim_model, num_heads, dim_k, bias=True)

    out = prepare_for_mha(x, w, b, num_heads, dim_k)
    out = jax.block_until_ready(out)

    ref = (x.reshape(-1, dim_model) @ w + b).reshape(seq, batch, num_heads, dim_k)
    assert out.shape == (seq, batch, num_heads, dim_k)
    assert jnp.allclose(out, ref, atol=1e-4, rtol=1e-4)

    # Ragged / no-bias path: exercises zero-padding + the bias-free kernel.
    seq2, batch2, dm2, nh2, dk2 = 5, 3, 48, 3, 20
    kx2, kp2 = jax.random.split(jax.random.PRNGKey(1))
    x2 = jax.random.normal(kx2, (seq2, batch2, dm2), jnp.float32)
    w2, _ = init_params(kp2, dm2, nh2, dk2, bias=False)
    out2 = jax.block_until_ready(prepare_for_mha(x2, w2, None, nh2, dk2))
    ref2 = (x2.reshape(-1, dm2) @ w2).reshape(seq2, batch2, nh2, dk2)
    assert out2.shape == (seq2, batch2, nh2, dk2)
    assert jnp.allclose(out2, ref2, atol=1e-4, rtol=1e-4)

    print("KERNEL_OK")
</pallas_src>

<mosaic_0001>
module attributes {stable_mosaic.version = 11 : i64} {
  func.func @_linear_bias_kernel(%arg0: i32, %arg1: i32, %arg2: i32, %arg3: memref<16x128xf32, #tpu.memory_space<vmem>>, %arg4: memref<128x128xf32, #tpu.memory_space<vmem>>, %arg5: memref<1x128xf32, #tpu.memory_space<vmem>>, %arg6: memref<16x128xf32, #tpu.memory_space<vmem>>, %arg7: memref<16x128xf32, #tpu.memory_space<vmem>>) attributes {dimension_semantics = [#tpu.dimension_semantics<parallel>, #tpu.dimension_semantics<parallel>, #tpu.dimension_semantics<arbitrary>], iteration_bounds = array<i64: 1, 1, 1>, scalar_prefetch = 0 : i64, scratch_operands = 1 : i64, tpu.core_type = #tpu.core_type<tc>, window_params = [{transform_indices = @transform_0, window_bounds = array<i64: 16, 128>}, {transform_indices = @transform_1, window_bounds = array<i64: 128, 128>}, {transform_indices = @transform_2, window_bounds = array<i64: 1, 128>}, {transform_indices = @transform_3, window_bounds = array<i64: 16, 128>}]} {
    %c0_i32 = arith.constant 0 : i32
    %0 = arith.cmpi eq, %arg2, %c0_i32 : i32
    %1 = arith.extui %0 : i1 to i32
    %c0_i32_0 = arith.constant 0 : i32
    %2 = arith.cmpi ne, %1, %c0_i32_0 : i32
    scf.if %2 {
      %c0_10 = arith.constant 0 : index
      %c0_11 = arith.constant 0 : index
      %12 = vector.load %arg5[%c0_10, %c0_11] : memref<1x128xf32, #tpu.memory_space<vmem>>, vector<1x128xf32>
      %13 = vector.shape_cast %12 : vector<1x128xf32> to vector<1x128xf32>
      %14 = vector.broadcast %13 : vector<1x128xf32> to vector<16x128xf32>
      %c0_12 = arith.constant 0 : index
      %c0_13 = arith.constant 0 : index
      %15 = vector.load %arg7[%c0_12, %c0_13] : memref<16x128xf32, #tpu.memory_space<vmem>>, vector<16x128xf32>
      tpu.vector_store %arg7[%c0_12, %c0_13], %14 {strides = array<i32>} : memref<16x128xf32, #tpu.memory_space<vmem>>, vector<16x128xf32>,
    } else {
    }
    %c0 = arith.constant 0 : index
    %c0_1 = arith.constant 0 : index
    %3 = vector.load %arg7[%c0, %c0_1] : memref<16x128xf32, #tpu.memory_space<vmem>>, vector<16x128xf32>
    %c0_2 = arith.constant 0 : index
    %c0_3 = arith.constant 0 : index
    %4 = vector.load %arg3[%c0_2, %c0_3] : memref<16x128xf32, #tpu.memory_space<vmem>>, vector<16x128xf32>
    %c0_4 = arith.constant 0 : index
    %c0_5 = arith.constant 0 : index
    %5 = vector.load %arg4[%c0_4, %c0_5] : memref<128x128xf32, #tpu.memory_space<vmem>>, vector<128x128xf32>
    %cst = arith.constant dense<0.000000e+00> : vector<16x128xf32>
    %6 = tpu.matmul %4, %5, %cst {dimension_numbers = #tpu.dot_dimension_numbers<[1], [0], [0], [1], [0, 0, 1, 1], [], []>} : vector<16x128xf32>, vector<128x128xf32>, vector<16x128xf32> -> vector<16x128xf32>
    %7 = arith.addf %3, %6 : vector<16x128xf32>
    %c0_6 = arith.constant 0 : index
    %c0_7 = arith.constant 0 : index
    %8 = vector.load %arg7[%c0_6, %c0_7] : memref<16x128xf32, #tpu.memory_space<vmem>>, vector<16x128xf32>
    tpu.vector_store %arg7[%c0_6, %c0_7], %7 {strides = array<i32>} : memref<16x128xf32, #tpu.memory_space<vmem>>, vector<16x128xf32>,
    %c0_i32_8 = arith.constant 0 : i32
    %9 = arith.cmpi eq, %arg2, %c0_i32_8 : i32
    %10 = arith.extui %9 : i1 to i32
    %c0_i32_9 = arith.constant 0 : i32
    %11 = arith.cmpi ne, %10, %c0_i32_9 : i32
    scf.if %11 {
      %c0_10 = arith.constant 0 : index
      %c0_11 = arith.constant 0 : index
      %12 = vector.load %arg7[%c0_10, %c0_11] : memref<16x128xf32, #tpu.memory_space<vmem>>, vector<16x128xf32>
      %c0_12 = arith.constant 0 : index
      %c0_13 = arith.constant 0 : index
      %13 = vector.load %arg6[%c0_12, %c0_13] : memref<16x128xf32, #tpu.memory_space<vmem>>, vector<16x128xf32>
      tpu.vector_store %arg6[%c0_12, %c0_13], %12 {strides = array<i32>} : memref<16x128xf32, #tpu.memory_space<vmem>>, vector<16x128xf32>,
    } else {
    }
    return
  }
  func.func @transform_0(%arg0: i32, %arg1: i32, %arg2: i32) -> (i32, i32) {
    %c0_i32 = arith.constant 0 : i32
    return %arg0, %arg2 : i32, i32
  }
  func.func @transform_1(%arg0: i32, %arg1: i32, %arg2: i32) -> (i32, i32) {
    %c0_i32 = arith.constant 0 : i32
    return %arg2, %arg1 : i32, i32
  }
  func.func @transform_2(%arg0: i32, %arg1: i32, %arg2: i32) -> (i32, i32) {
    %c0_i32 = arith.constant 0 : i32
    %c0_i32_0 = arith.constant 0 : i32
    return %c0_i32, %arg1 : i32, i32
  }
  func.func @transform_3(%arg0: i32, %arg1: i32, %arg2: i32) -> (i32, i32) {
    %c0_i32 = arith.constant 0 : i32
    return %arg0, %arg1 : i32, i32
  }
}

</mosaic_0001>

<llo_original>
// kernel: tpu_custom_call.1
$region0: #{tpu_custom_call.1}
  #allocation0 [shape = 'u32[]', space=smem, size = 0x4, offset = 0x4, fixed_abs, tag = 'smem constant byte address 0x4 - core index']
  #allocation1 [shape = 'u32[144,128]{1,0:T(1,128)}', space=vmem, size = 0x12000, scoped, tag = 'internal scratch']
  #allocation2 [shape = 'f32[16,128]{1,0:T(8,128)}', space=vmem, size = 0x2000, scoped, tag = 'scratch operand']
  %s0 = inlined_call_operand.hbm [shape: f32[16,128], index: 0, kind: input, shape index: {}]
  %s1 = inlined_call_operand.hbm [shape: f32[128,128], index: 1, kind: input, shape index: {}]
  %s2 = inlined_call_operand.vmem [shape: f32[1,128], index: 2, kind: input, shape index: {}]
  %s3 = inlined_call_operand.hbm [shape: f32[16,128], index: 3, kind: output, shape index: {}]
  %s4 = sld [smem:[#allocation0]]
  $region38: #{tpu_custom_call.1} parent=0
    _
  %s6 = ssub.s32 1, %s4
  %s7 = scalar_select 0, %s6, %s4
  $region1: #{tpu_custom_call.1} parent=0
    #allocation3 [shape = 'u8[8192]{0}', space=vmem, size = 0x2000, scoped, tag = 'input window, operand 0, single buffered']
    #allocation4 [shape = 's32[1]{0}', space=sflag, size = 0x4, scoped, tag = 'scoped memory for tpu_custom_call.1']
    #allocation5 [shape = 's32[1]{0}', space=sflag, size = 0x4, scoped, tag = 'scoped memory for tpu_custom_call.1']
    #allocation6 [shape = 'u8[65536]{0}', space=vmem, size = 0x10000, scoped, tag = 'input window, operand 1, single buffered']
    #allocation7 [shape = 's32[1]{0}', space=sflag, size = 0x4, scoped, tag = 'scoped memory for tpu_custom_call.1']
    #allocation8 [shape = 'u8[8192]{0}', space=vmem, size = 0x2000, scoped, tag = 'output window, operand 0, single buffered']
    %8 = vsyncpa [#allocation4], 0
    %9 = vsyncpa [#allocation7], 0
    %10 = vsyncpa [#allocation5], 0
    // Predicated region
    $region2: #{tpu_custom_call.1} parent=1 // pred_check
      _
    $region3: #{tpu_custom_call.1} parent=1 // pred_check_branch
      %12 = sbr.rel (0) target = $region5
    $region4: #{tpu_custom_call.1} parent=1 // pred_region
      %s14 = ssub.s32 256, 256
      %15 = vsyncadd [#allocation4], %s14
      %s16 = sshll.u32 [#allocation3], 4
      %s17 = int_to_ptr.vmem [resolvable:$true] %s16
      %22 = dma.hbm_to_vmem [thread:$0]  %s0, 256, %s17, [#allocation4], 128, 128, 8
    $region5: #{tpu_custom_call.1} parent=1 // pred_fallthru
      _
    // Predicated region
    $region6: #{tpu_custom_call.1} parent=1 // pred_check
      _
    $region7: #{tpu_custom_call.1} parent=1 // pred_check_branch
      %24 = sbr.rel (0) target = $region9
    $region8: #{tpu_custom_call.1} parent=1 // pred_region
      %s26 = ssub.s32 2048, 2048
      %27 = vsyncadd [#allocation7], %s26
      %s28 = sshll.u32 [#allocation6], 4
      %s29 = int_to_ptr.vmem [resolvable:$true] %s28
      %34 = dma.hbm_to_vmem [thread:$0]  %s1, 2048, %s29, [#allocation7], 128, 128, 8
    $region9: #{tpu_custom_call.1} parent=1 // pred_fallthru
      _
    // Predicated region
    $region10: #{tpu_custom_call.1} parent=1 // pred_check
      _
    $region11: #{tpu_custom_call.1} parent=1 // pred_check_branch
      %36 = sbr.rel (0) target = $region13
    $region12: #{tpu_custom_call.1} parent=1 // pred_region
      _
    $region13: #{tpu_custom_call.1} parent=1 // pred_fallthru
      _
    // Predicated region
    $region14: #{tpu_custom_call.1} parent=1 // pred_check
      _
    $region15: #{tpu_custom_call.1} parent=1 // pred_check_branch
      %38 = sbr.rel (0) target = $region17
    $region16: #{tpu_custom_call.1} parent=1 // pred_region
      %39 = dma.done [#allocation4], 256
    $region17: #{tpu_custom_call.1} parent=1 // pred_fallthru
      _
    // Predicated region
    $region18: #{tpu_custom_call.1} parent=1 // pred_check
      _
    $region19: #{tpu_custom_call.1} parent=1 // pred_check_branch
      %41 = sbr.rel (0) target = $region21
    $region20: #{tpu_custom_call.1} parent=1 // pred_region
      %42 = dma.done [#allocation7], 2048
    $region21: #{tpu_custom_call.1} parent=1 // pred_fallthru
      _
    %p43 = scmp.eq.s32.totalorder 0, 0
    // Predicated region
    $region22: #{tpu_custom_call.1} parent=1 // pred_check
      %p44 = pneg %p43
    $region23: #{tpu_custom_call.1} parent=1 // pred_check_branch
      %46 = sbr.rel (%p44) target = $region25
    $region24: #{tpu_custom_call.1} parent=1 // pred_region
      %v47 = vld [vmem:[%s2] sm:$0x1]
      %v49 = vlaneseq
      %v50 = vshrl.u32 %v49, 7
      %v51 = vsub.s32 0, %v50
      %v52 = vrot.slane %v47, %v51
      %54 = vst [vmem:[#allocation2] sm:$0xff] %v52
      %55 = vst [vmem:[#allocation2 + $0x8] sm:$0xff] %v52
    $region25: #{tpu_custom_call.1} parent=1 // pred_fallthru
      _
    %v56 = vld [vmem:[#allocation2] sm:$0xff]
    %v57 = vld [vmem:[#allocation2 + $0x8] sm:$0xff]
    %v58 = vld [vmem:[#allocation3] sm:$0xff]
    %v59 = vld [vmem:[#allocation3 + $0x8] sm:$0xff]
    %v60 = vld [vmem:[#allocation6] sm:$0xff]
    %v61 = vld [vmem:[#allocation6 + $0x8] sm:$0xff]
    %v62 = vld [vmem:[#allocation6 + $0x10] sm:$0xff]
    %v63 = vld [vmem:[#allocation6 + $0x18] sm:$0xff]
    %v64 = vld [vmem:[#allocation6 + $0x20] sm:$0xff]
    %v65 = vld [vmem:[#allocation6 + $0x28] sm:$0xff]
    %v66 = vld [vmem:[#allocation6 + $0x30] sm:$0xff]
    %v67 = vld [vmem:[#allocation6 + $0x38] sm:$0xff]
    %v68 = vld [vmem:[#allocation6 + $0x40] sm:$0xff]
    %v69 = vld [vmem:[#allocation6 + $0x48] sm:$0xff]
    %v70 = vld [vmem:[#allocation6 + $0x50] sm:$0xff]
    %v71 = vld [vmem:[#allocation6 + $0x58] sm:$0xff]
    %v72 = vld [vmem:[#allocation6 + $0x60] sm:$0xff]
    %v73 = vld [vmem:[#allocation6 + $0x68] sm:$0xff]
    %v74 = vld [vmem:[#allocation6 + $0x70] sm:$0xff]
    %v75 = vld [vmem:[#allocation6 + $0x78] sm:$0xff]
    %76 = vmatprep.subr.mxu0 0.0
    %77 = vmatpush1.msra.mxu0 %v60
    %78 = vmatprep.subr.mxu0 0.0
    %79 = vmatpush1.msra.mxu0 %v61
    %80 = vmatprep.subr.mxu0 0.0
    %81 = vmatpush1.msra.mxu0 %v62
    %82 = vmatprep.subr.mxu0 0.0
    %83 = vmatpush1.msra.mxu0 %v63
    %84 = vmatprep.subr.mxu0 0.0
    %85 = vmatpush1.msra.mxu0 %v64
    %86 = vmatprep.subr.mxu0 0.0
    %87 = vmatpush1.msra.mxu0 %v65
    %88 = vmatprep.subr.mxu0 0.0
    %89 = vmatpush1.msra.mxu0 %v66
    %90 = vmatprep.subr.mxu0 0.0
    %91 = vmatpush1.msra.mxu0 %v67
    %92 = vmatprep.subr.mxu0 0.0
    %93 = vmatpush1.msra.mxu0 %v68
    %94 = vmatprep.subr.mxu0 0.0
    %95 = vmatpush1.msra.mxu0 %v69
    %96 = vmatprep.subr.mxu0 0.0
    %97 = vmatpush1.msra.mxu0 %v70
    %98 = vmatprep.subr.mxu0 0.0
    %99 = vmatpush1.msra.mxu0 %v71
    %100 = vmatprep.subr.mxu0 0.0
    %101 = vmatpush1.msra.mxu0 %v72
    %102 = vmatprep.subr.mxu0 0.0
    %103 = vmatpush1.msra.mxu0 %v73
    %104 = vmatprep.subr.mxu0 0.0
    %105 = vmatpush1.msra.mxu0 %v74
    %106 = vmatprep.subr.mxu0 0.0
    %107 = vmatpush1.msra.mxu0 %v75
    %108 = vmatprep.subr.mxu0 0.0
    %109 = vmatpush1.msra.mxu0 0.0
    %110 = vmatprep.subr.mxu0 0.0
    %111 = vmatpush1.msra.mxu0 0.0
    %112 = vmatprep.subr.mxu0 0.0
    %113 = vmatpush1.msra.mxu0 0.0
    %114 = vmatprep.subr.mxu0 0.0
    %115 = vmatpush1.msra.mxu0 0.0
    %116 = vmatprep.subr.mxu0 0.0
    %117 = vmatpush1.msra.mxu0 0.0
    %118 = vmatprep.subr.mxu0 0.0
    %119 = vmatpush1.msra.mxu0 0.0
    %120 = vmatprep.subr.mxu0 0.0
    %121 = vmatpush1.msra.mxu0 0.0
    %122 = vmatprep.subr.mxu0 0.0
    %123 = vmatpush1.msra.mxu0 0.0
    %124 = vmatprep.subr.mxu0 0.0
    %125 = vmatpush1.msra.mxu0 0.0
    %126 = vmatprep.subr.mxu0 0.0
    %127 = vmatpush1.msra.mxu0 0.0
    %128 = vmatprep.subr.mxu0 0.0
    %129 = vmatpush1.msra.mxu0 0.0
    %130 = vmatprep.subr.mxu0 0.0
    %131 = vmatpush1.msra.mxu0 0.0
    %132 = vmatprep.subr.mxu0 0.0
    %133 = vmatpush1.msra.mxu0 0.0
    %134 = vmatprep.subr.mxu0 0.0
    %135 = vmatpush1.msra.mxu0 0.0
    %136 = vmatprep.subr.mxu0 0.0
    %137 = vmatpush1.msra.mxu0 0.0
    %138 = vmatprep.subr.mxu0 0.0
    %139 = vmatpush1.msra.mxu0 0.0
    %140 = vmatprep.mubr.f32.mxu0 0.0
    %141 = vmatmul.mubr.f32.gmra.mrb[0].mxu0 %v58
    %v142 = vpop.f32.mrb[0].mxu0
    %v143 = vadd.f32 0.0, %v142
    %v144 = vpop.f32.mrb[0].mxu0
    %145 = vmatprep.mubr.f32.mxu0 0.0
    %146 = vmatmul.mubr.f32.gmra.mrb[0].mxu0 %v59
    %v147 = vpop.f32.mrb[0].mxu0
    %v148 = vadd.f32 0.0, %v147
    %v149 = vpop.f32.mrb[0].mxu0
    %150 = vdwg.mxu0
    %v151 = vadd.f32 %v56, %v143
    %v152 = vadd.f32 %v57, %v148
    %153 = vst [vmem:[#allocation2] sm:$0xff] %v151
    %154 = vst [vmem:[#allocation2 + $0x8] sm:$0xff] %v152
    // Predicated region
    $region26: #{tpu_custom_call.1} parent=1 // pred_check
      %p155 = pneg %p43
    $region27: #{tpu_custom_call.1} parent=1 // pred_check_branch
      %157 = sbr.rel (%p155) target = $region29
    $region28: #{tpu_custom_call.1} parent=1 // pred_region
      %v158 = vld [vmem:[#allocation2] sm:$0xff]
      %v159 = vld [vmem:[#allocation2 + $0x8] sm:$0xff]
      %160 = vst [vmem:[#allocation8] sm:$0xff] %v158
      %161 = vst [vmem:[#allocation8 + $0x8] sm:$0xff] %v159
    $region29: #{tpu_custom_call.1} parent=1 // pred_fallthru
      _
    // Predicated region
    $region30: #{tpu_custom_call.1} parent=1 // pred_check
      _
    $region31: #{tpu_custom_call.1} parent=1 // pred_check_branch
      %163 = sbr.rel (0) target = $region33
    $region32: #{tpu_custom_call.1} parent=1 // pred_region
      %s165 = ssub.s32 256, 256
      %166 = vsyncadd [#allocation5], %s165
      %s167 = sshll.u32 [#allocation8], 4
      %s168 = int_to_ptr.vmem [resolvable:$true] %s167
      %173 = dma.vmem_to_hbm [thread:$0]  %s168, 256, %s3, [#allocation5], 128, 128, 8
    $region33: #{tpu_custom_call.1} parent=1 // pred_fallthru
      _
    // Predicated region
    $region34: #{tpu_custom_call.1} parent=1 // pred_check
      _
    $region35: #{tpu_custom_call.1} parent=1 // pred_check_branch
      %175 = sbr.rel (0) target = $region37
    $region36: #{tpu_custom_call.1} parent=1 // pred_region
      %176 = dma.done [#allocation5], 256
    $region37: #{tpu_custom_call.1} parent=1 // pred_fallthru
      _
    %177 = vsyncpa [#allocation4], 1
    %178 = vsyncpa [#allocation7], 1
    %179 = vsyncpa [#allocation5], 1

</llo_original>
